<compile_context>
chip_gen: v5e
topology: v5e:2x2
jax: 0.10.0
libtpu: 0.0.40
codegen_flags: <defaults>
</compile_context>

<pallas_src>
import jax
import jax.numpy as jnp
from jax.experimental import pallas as pl
from jax.experimental.pallas import tpu as pltpu


# ---------------------------------------------------------------------------
# Kernel: chunked HBM->HBM DMA copy (no VMEM staging, no grid).
# src/dst stay in memory_space=pl.ANY; the kernel drives the DMAs itself.
# ---------------------------------------------------------------------------
def _dma_capture_kernel(src_ref, dst_ref, sems):
    n_chunks = src_ref.shape[0]  # static: baked in at trace time
    # Start every chunk DMA first so several are outstanding on the DMA
    # engines, then wait on each.  n_chunks == 1 degenerates to the single
    # whole-array copy (minimum overhead for small activations).
    for i in range(n_chunks):
        pltpu.make_async_copy(src_ref.at[i], dst_ref.at[i], sems.at[i]).start()
    for i in range(n_chunks):
        pltpu.make_async_copy(src_ref.at[i], dst_ref.at[i], sems.at[i]).wait()


_CHUNK_MIN_BYTES = 1 << 20  # never split below ~1 MiB per chunk
_MAX_CHUNKS = 8


def _num_chunks(n_elems: int, itemsize: int) -> int:
    nbytes = n_elems * itemsize
    if nbytes < 2 * _CHUNK_MIN_BYTES:
        return 1
    for c in (_MAX_CHUNKS, 4, 2):
        if n_elems % c == 0 and (nbytes // c) >= _CHUNK_MIN_BYTES:
            return c
    return 1


def _pallas_copy(x: jax.Array) -> jax.Array:
    """Materialize a decoupled copy of `x` (any rank/dtype) via Pallas DMAs."""
    itemsize = jnp.dtype(x.dtype).itemsize
    n_elems = int(x.size)
    n_chunks = _num_chunks(n_elems, itemsize)
    # Contiguous reshape to (n_chunks, chunk) is layout plumbing (free).
    x2 = jnp.reshape(x, (n_chunks, n_elems // n_chunks))
    out2 = pl.pallas_call(
        _dma_capture_kernel,
        out_shape=jax.ShapeDtypeStruct(x2.shape, x2.dtype),
        in_specs=[pl.BlockSpec(memory_space=pl.ANY)],
        out_specs=pl.BlockSpec(memory_space=pl.ANY),
        scratch_shapes=[pltpu.SemaphoreType.DMA((n_chunks,))],
        # Pure-bandwidth op: read once, write once.
        cost_estimate=pl.CostEstimate(
            flops=0, transcendentals=0, bytes_accessed=2 * n_elems * itemsize
        ),
    )(x2)
    return jnp.reshape(out2, x.shape)


# ---------------------------------------------------------------------------
# Autodiff: pallas_call has no AD rule; the copy is an identity, so give it an
# identity VJP.  Keeps gradients correct in the layer.training=True path
# (where PyTorch intentionally does NOT detach).
# ---------------------------------------------------------------------------
@jax.custom_vjp
def pallas_capture(x: jax.Array) -> jax.Array:
    return _pallas_copy(x)


def _capture_fwd(x):
    return _pallas_copy(x), None


def _capture_bwd(_, g):
    return (g,)


pallas_capture.defvjp(_capture_fwd, _capture_bwd)


# ---------------------------------------------------------------------------
# Module port
# ---------------------------------------------------------------------------
class _DummyLayer:
    """Stand-in for the hooked nn.Module; only `.training` is consulted."""

    def __init__(self, training: bool = False):
        self.training = training


class ActivationCapturer:
    """JAX/Pallas port of unlimiformer.ActivationCapturer (a forward hook).

    materialize=False (default): faithful PyTorch semantics — store a
        reference to the activation (stop_gradient ~ .detach()); zero copies.
    materialize=True: additionally run the Pallas DMA kernel so `captured`
        is a decoupled buffer (useful for donation / lifetime reasons).
    """

    def __init__(self, layer, capture_input: bool = False, materialize: bool = False):
        self.layer = layer
        self.capture_input = capture_input
        self.materialize = materialize
        self.captured = None

    def __call__(self, module, input, output):
        # In a PyTorch forward hook `input` is a tuple of positional args;
        # per the reference module we capture that object as-is.  Support
        # arbitrary pytrees of activations.
        cap = input if self.capture_input else output
        if not self.layer.training:
            # torch .detach()  ->  stop_gradient (no runtime compute, no copy).
            cap = jax.tree_util.tree_map(jax.lax.stop_gradient, cap)
        if self.materialize:
            # Optional decoupled buffer: runs the Pallas chunked-DMA kernel.
            cap = jax.tree_util.tree_map(pallas_capture, cap)
        self.captured = cap
        # PyTorch forward hooks return None: never replace the module output,
        # so downstream ops stay data-independent of the capture.
        return None

    # mirror nn.Module's hook signature name for clarity
    forward = __call__


if __name__ == "__main__":
    key = jax.random.PRNGKey(0)
    k1, k2, k3, k4, k5 = jax.random.split(key, 5)

    eval_layer = _DummyLayer(training=False)

    # --- Case 1: NCHW conv-style activation, eval mode, capture_output ------
    x_in = jax.random.normal(k1, (2, 4, 16, 16), dtype=jnp.float32)
    x_out = jax.random.normal(k2, (2, 4, 16, 16), dtype=jnp.float32)
    cap_out = ActivationCapturer(eval_layer, capture_input=False, materialize=True)
    ret = cap_out(eval_layer, (x_in,), x_out)
    jax.block_until_ready(cap_out.captured)
    assert ret is None                                  # hook returns nothing
    assert cap_out.captured.shape == x_out.shape
    assert cap_out.captured.dtype == x_out.dtype
    assert bool(jnp.all(cap_out.captured == x_out))

    # --- Case 2: [B, S, D] bf16 attention state as the hook's input tuple ---
    x_seq = jax.random.normal(k3, (2, 8, 32), dtype=jnp.bfloat16)
    cap_in = ActivationCapturer(eval_layer, capture_input=True, materialize=True)
    cap_in(eval_layer, (x_seq,), x_out)
    jax.block_until_ready(cap_in.captured)
    assert isinstance(cap_in.captured, tuple) and len(cap_in.captured) == 1
    assert cap_in.captured[0].shape == x_seq.shape
    assert cap_in.captured[0].dtype == x_seq.dtype
    assert bool(jnp.all(cap_in.captured[0] == x_seq))

    # --- Case 3: default zero-copy capture (faithful .detach() semantics) ---
    cap_ref = ActivationCapturer(eval_layer, capture_input=False)
    cap_ref(eval_layer, (x_in,), x_out)
    assert bool(jnp.all(cap_ref.captured == x_out))

    # --- Case 4: larger activation -> chunked concurrent DMAs (4 x 1 MiB) ---
    x_big = jax.random.normal(k4, (8, 256, 512), dtype=jnp.float32)  # 4 MiB
    cap_big = ActivationCapturer(eval_layer, capture_input=False, materialize=True)
    cap_big(eval_layer, (x_big,), x_big)
    jax.block_until_ready(cap_big.captured)
    assert bool(jnp.all(cap_big.captured == x_big))

    # --- Case 5: training mode (no detach) — gradients flow via custom_vjp --
    train_layer = _DummyLayer(training=True)
    cap_tr = ActivationCapturer(train_layer, capture_input=False, materialize=True)
    x_tr = jax.random.normal(k5, (8, 128), dtype=jnp.float32)

    def loss(z):
        cap_tr(train_layer, (z,), z)
        return jnp.sum(cap_tr.captured * 2.0)

    g = jax.grad(loss)(x_tr)
    jax.block_until_ready(g)
    assert bool(jnp.allclose(g, 2.0))

    print("KERNEL_OK")
</pallas_src>

<mosaic_0001>
module attributes {stable_mosaic.version = 11 : i64} {
  func.func @_dma_capture_kernel(%arg0: memref<1x2048xf32, #tpu.memory_space<any>>, %arg1: memref<1x2048xf32, #tpu.memory_space<any>>, %arg2: memref<1x!tpu.dma_semaphore, #tpu.memory_space<semaphore_mem>>) attributes {dimension_semantics = [], scalar_prefetch = 0 : i64, scratch_operands = 1 : i64, tpu.core_type = #tpu.core_type<tc>} {
    %c0_i32 = arith.constant 0 : i32
    %c0_i32_0 = arith.constant 0 : i32
    %c0_i32_1 = arith.constant 0 : i32
    %c0_i32_2 = arith.constant 0 : i32
    %0 = tpu.memref_slice %arg0[%c0_i32, %c0_i32_2] : memref<1x2048xf32, #tpu.memory_space<any>> -> memref<1x2048xf32, #tpu.memory_space<any>>
    %1 = tpu.memref_squeeze %0 : memref<1x2048xf32, #tpu.memory_space<any>> -> memref<2048xf32, #tpu.memory_space<any>>
    %c0_i32_3 = arith.constant 0 : i32
    %2 = tpu.memref_slice %arg1[%c0_i32_0, %c0_i32_3] : memref<1x2048xf32, #tpu.memory_space<any>> -> memref<1x2048xf32, #tpu.memory_space<any>>
    %3 = tpu.memref_squeeze %2 : memref<1x2048xf32, #tpu.memory_space<any>> -> memref<2048xf32, #tpu.memory_space<any>>
    %4 = tpu.memref_slice %arg2[%c0_i32_1] : memref<1x!tpu.dma_semaphore, #tpu.memory_space<semaphore_mem>> -> memref<1x!tpu.dma_semaphore, #tpu.memory_space<semaphore_mem>>
    %5 = tpu.memref_squeeze %4 : memref<1x!tpu.dma_semaphore, #tpu.memory_space<semaphore_mem>> -> memref<!tpu.dma_semaphore, #tpu.memory_space<semaphore_mem>>
    tpu.enqueue_dma source(%1 : memref<2048xf32, #tpu.memory_space<any>>) target(%3 : memref<2048xf32, #tpu.memory_space<any>>) target_semaphore(%5 : memref<!tpu.dma_semaphore, #tpu.memory_space<semaphore_mem>>)
    %c0_i32_4 = arith.constant 0 : i32
    %c0_i32_5 = arith.constant 0 : i32
    %c0_i32_6 = arith.constant 0 : i32
    %c0_i32_7 = arith.constant 0 : i32
    %6 = tpu.memref_slice %arg0[%c0_i32_4, %c0_i32_7] : memref<1x2048xf32, #tpu.memory_space<any>> -> memref<1x2048xf32, #tpu.memory_space<any>>
    %7 = tpu.memref_squeeze %6 : memref<1x2048xf32, #tpu.memory_space<any>> -> memref<2048xf32, #tpu.memory_space<any>>
    %c0_i32_8 = arith.constant 0 : i32
    %8 = tpu.memref_slice %arg1[%c0_i32_5, %c0_i32_8] : memref<1x2048xf32, #tpu.memory_space<any>> -> memref<1x2048xf32, #tpu.memory_space<any>>
    %9 = tpu.memref_squeeze %8 : memref<1x2048xf32, #tpu.memory_space<any>> -> memref<2048xf32, #tpu.memory_space<any>>
    %10 = tpu.memref_slice %arg2[%c0_i32_6] : memref<1x!tpu.dma_semaphore, #tpu.memory_space<semaphore_mem>> -> memref<1x!tpu.dma_semaphore, #tpu.memory_space<semaphore_mem>>
    %11 = tpu.memref_squeeze %10 : memref<1x!tpu.dma_semaphore, #tpu.memory_space<semaphore_mem>> -> memref<!tpu.dma_semaphore, #tpu.memory_space<semaphore_mem>>
    tpu.wait_dma2 semaphore(%11 : memref<!tpu.dma_semaphore, #tpu.memory_space<semaphore_mem>>) src(%7 : memref<2048xf32, #tpu.memory_space<any>>) dst(%9 : memref<2048xf32, #tpu.memory_space<any>>)
    return
  }
}

</mosaic_0001>

<llo_original>
// kernel: tpu_custom_call.1
$region0: #{tpu_custom_call.1}
  #allocation0 [shape = 'u32[]', space=smem, size = 0x4, offset = 0x4, fixed_abs, tag = 'smem constant byte address 0x4 - core index']
  #allocation1 [shape = 'u32[72,128]{1,0:T(1,128)}', space=vmem, size = 0x9000, scoped, tag = 'internal scratch']
  #allocation2 [shape = 's32[1]{0}', space=sflag, size = 0x4, scoped, tag = 'scratch operand']
  #allocation3 [shape = 's32[]', space=sflag, size = 0x4, offset = 0, fixed_abs, tag = 'sflag constant byte address 0x0 - dummy sync flag']
  #allocation4 [shape = 'u32[0]{0}', space=smem, size = 0, offset = 0, fixed_abs, tag = 'smem constant byte address 0x0 - null']
  %s0 = inlined_call_operand.hbm [shape: f32[1,2048], index: 0, kind: input, shape index: {}]
  %s1 = inlined_call_operand.hbm [shape: f32[1,2048], index: 1, kind: output, shape index: {}]
  %s2 = sld [smem:[#allocation0]]
  $region2: #{tpu_custom_call.1} parent=0
    _
  %s4 = ssub.s32 1, %s2
  %s5 = scalar_select 0, %s4, %s2
  %s7 = sshll.u32 1, 14
  %s8 = sxor.u32 4294967295, %s7
  %s10 = sshll.u32 %s0, 4
  %s11 = int_to_ptr.hbm [resolvable:$true] %s10
  %s12 = sshll.u32 %s1, 4
  %s13 = int_to_ptr.hbm [resolvable:$true] %s12
  %16 = dma.general %s11, 256, %s13, [#allocation2], [#allocation3], [#allocation4], 0, 0
  %18 = dma.done [#allocation2], 256
  %19 = vsyncmov [#allocation2]
  %s20 = vpop.sfrf %19
  %p21 = scmp.eq.s32.totalorder %s20, 0
  %p22 = pneg %p21
  %24 = shalt.err (%p22)

</llo_original>
